<compile_context>
chip_gen: v5e
topology: v5e:2x2
jax: 0.10.0
libtpu: 0.0.40
codegen_flags: <defaults>
</compile_context>

<pallas_src>
import jax
import jax.numpy as jnp
from jax.experimental import pallas as pl
from jax.experimental.pallas import tpu as pltpu


# ----------------------------------------------------------------------------
# Kernels
# ----------------------------------------------------------------------------

def scse_fused_kernel(x_ref, w1t_ref, b1_ref, w2t_ref, b2_ref, wsc_ref, bs_ref,
                      o_ref):
    """Fully fused SCSE: one HBM read of x, one HBM write of out.

    Block shapes:
      x_ref / o_ref : (Nb, C, HW)  whole image(s) per grid step
      w1t_ref       : (C, Cr)      cSE squeeze weight (pre-transposed)
      b1_ref        : (1, Cr)
      w2t_ref       : (Cr, C)      cSE excite weight (pre-transposed)
      b2_ref        : (1, C)
      wsc_ref       : (C, 1)       sSE 1x1-conv weight column
      bs_ref        : (1, 1)       sSE bias scalar (SMEM)
    """
    x = x_ref[...]                                          # (Nb, C, HW)
    hw = x.shape[2]

    # cSE: global average pool + two tiny matmuls + sigmoid (rows independent,
    # so a masked tail block along N cannot contaminate real images).
    s = jnp.sum(x, axis=2) * (1.0 / hw)                     # (Nb, C)
    hid = jnp.dot(s, w1t_ref[...],
                  preferred_element_type=jnp.float32) + b1_ref[...]
    hid = jnp.maximum(hid, 0.0)                             # (Nb, Cr)
    g = jax.nn.sigmoid(jnp.dot(hid, w2t_ref[...],
                               preferred_element_type=jnp.float32)
                       + b2_ref[...])                       # (Nb, C)

    # sSE: per-pixel channel reduction on VPU + sublane reduce (no MXU).
    sp = jnp.sum(x * wsc_ref[...][None, :, :], axis=1, keepdims=True) \
        + bs_ref[0, 0]
    sp = jax.nn.sigmoid(sp)                                 # (Nb, 1, HW)

    # Fused gate combine: x*(g+sp) == x*cSE + x*sSE (one full-size multiply).
    # Re-read x_ref so the compiler can stream from the resident input buffer.
    o_ref[...] = (x_ref[...] * (g[:, :, None] + sp)).astype(o_ref.dtype)


def scse_apply_kernel(x_ref, g_ref, wsc_ref, bs_ref, o_ref):
    """Streaming gate-apply (fallback when one image does not fit in a block).
    cSE gates `g` are precomputed outside (they need the full H*W mean).

    Block shapes: x/o (Nb, C, T), g (Nb, C, 1), wsc (C, 1), bs (1, 1) SMEM.
    The C-axis reduction is fully in-bounds, so garbage lanes in a ragged tail
    tile only affect columns that Pallas masks out of the store.
    """
    sp = jnp.sum(x_ref[...] * wsc_ref[...][None, :, :], axis=1, keepdims=True) \
        + bs_ref[0, 0]
    sp = jax.nn.sigmoid(sp)                                 # (Nb, 1, T)
    o_ref[...] = (x_ref[...] * (g_ref[...] + sp)).astype(o_ref.dtype)


# ----------------------------------------------------------------------------
# Planning
# ----------------------------------------------------------------------------

def _plan(N, C, HW, itemsize, block_budget_bytes):
    """Return (fused, Nb, T).

    fused : whole image(s) per block -> cSE computed in-kernel.
    Nb    : images per grid step.
    T     : HW tile (lane axis); == HW on the fused path.

    Keeps >= 2 grid steps whenever N >= 2 (v7x megacore + pipelining) and the
    per-step block within `block_budget_bytes`.
    """
    per_image = C * HW * itemsize
    if per_image <= block_budget_bytes:
        if N >= 2:
            target_steps = min(8, N)            # ideally ~8 steps, at least 2
            nb_cap = max(1, N // target_steps)
            nb_cap = min(nb_cap, (N + 1) // 2)  # never fewer than 2 grid steps
        else:
            nb_cap = 1
        nb = max(1, min(nb_cap, block_budget_bytes // per_image))
        return True, nb, HW

    # Streaming: largest 128-multiple HW tile within the budget (no divisor
    # walk); ragged tail handled by a cdiv grid + masked stores.
    t = (block_budget_bytes // (C * itemsize)) // 128 * 128
    t = max(128, min(t, -(-HW // 128) * 128))
    return False, 1, t


# ----------------------------------------------------------------------------
# Forward
# ----------------------------------------------------------------------------

def scse_forward(x, w1, b1, w2, b2, ws, bs, *,
                 block_budget_bytes=4 * 1024 * 1024):
    """x: (N, C, H, W) float32. Weights follow PyTorch Conv2d 1x1 semantics,
    pre-reshaped to 2D: w1 (Cr, C), b1 (Cr, 1), w2 (C, Cr), b2 (C, 1),
    ws (1, C), bs (1, 1)."""
    N, C, H, W = x.shape
    HW = H * W
    xr = x.reshape(N, C, HW)                    # bitcast view: no HBM pass
    wsc = ws.reshape(C, 1).astype(x.dtype)      # sSE weight column (VPU path)

    fused, Nb, T = _plan(N, C, HW, x.dtype.itemsize, block_budget_bytes)

    # Scoped-VMEM limit from the real per-step footprint: 2x double-buffered
    # (in + out) plus ~2 block-sized temporaries, with padded tiles + margin.
    c_pad = -(-C // 8) * 8
    t_pad = -(-T // 128) * 128
    block_bytes = Nb * c_pad * t_pad * x.dtype.itemsize
    vmem_limit = int(min(max(6 * block_bytes + (4 << 20), 16 << 20), 40 << 20))

    if fused:
        Cr = w1.shape[0]
        w1t = w1.T.astype(jnp.float32)          # (C, Cr)
        b1r = b1.reshape(1, Cr).astype(jnp.float32)
        w2t = w2.T.astype(jnp.float32)          # (Cr, C)
        b2r = b2.reshape(1, C).astype(jnp.float32)

        out = pl.pallas_call(
            scse_fused_kernel,
            out_shape=jax.ShapeDtypeStruct((N, C, HW), x.dtype),
            grid=(pl.cdiv(N, Nb),),
            in_specs=[
                pl.BlockSpec((Nb, C, HW), lambda n: (n, 0, 0)),   # x stream
                pl.BlockSpec((C, Cr), lambda n: (0, 0)),          # cSE W1^T
                pl.BlockSpec((1, Cr), lambda n: (0, 0)),          # cSE b1
                pl.BlockSpec((Cr, C), lambda n: (0, 0)),          # cSE W2^T
                pl.BlockSpec((1, C), lambda n: (0, 0)),           # cSE b2
                pl.BlockSpec((C, 1), lambda n: (0, 0)),           # sSE weight
                pl.BlockSpec(memory_space=pltpu.MemorySpace.SMEM),  # sSE bias
            ],
            out_specs=pl.BlockSpec((Nb, C, HW), lambda n: (n, 0, 0)),
            compiler_params=pltpu.CompilerParams(
                dimension_semantics=("parallel",),
                vmem_limit_bytes=vmem_limit),
        )(xr, w1t, b1r, w2t, b2r, wsc, bs)
    else:
        # Hoisted cSE (needs the full H*W mean; keeps the two tiny matmuls off
        # the streaming critical path). Only taken for images too big for VMEM.
        s = jnp.mean(xr, axis=2)                            # (N, C)
        hid = jnp.maximum(s @ w1.T + b1[:, 0], 0.0)         # (N, Cr)
        g = jax.nn.sigmoid(hid @ w2.T + b2[:, 0])           # (N, C)
        g = g[:, :, None].astype(x.dtype)                   # (N, C, 1)

        out = pl.pallas_call(
            scse_apply_kernel,
            out_shape=jax.ShapeDtypeStruct((N, C, HW), x.dtype),
            grid=(pl.cdiv(N, Nb), pl.cdiv(HW, T)),
            in_specs=[
                pl.BlockSpec((Nb, C, T), lambda n, h: (n, 0, h)),   # x stream
                pl.BlockSpec((Nb, C, 1), lambda n, h: (n, 0, 0)),   # cSE gates
                pl.BlockSpec((C, 1), lambda n, h: (0, 0)),          # sSE weight
                pl.BlockSpec(memory_space=pltpu.MemorySpace.SMEM),  # sSE bias
            ],
            out_specs=pl.BlockSpec((Nb, C, T), lambda n, h: (n, 0, h)),
            compiler_params=pltpu.CompilerParams(
                dimension_semantics=("parallel", "parallel"),
                vmem_limit_bytes=vmem_limit),
        )(xr, g, wsc, bs)

    return out.reshape(N, C, H, W)


def scse_reference(x, w1, b1, w2, b2, ws, bs):
    """Plain-JAX reference matching the PyTorch module."""
    s = jnp.mean(x, axis=(2, 3))                            # (N, C)
    hid = jnp.maximum(s @ w1.T + b1[:, 0], 0.0)             # (N, Cr)
    g = jax.nn.sigmoid(hid @ w2.T + b2[:, 0])               # (N, C)
    cse = g[:, :, None, None]
    sp = jnp.einsum('nchw,c->nhw', x, ws[0]) + bs[0, 0]     # (N, H, W)
    sse = jax.nn.sigmoid(sp)[:, None, :, :]
    return x * cse + x * sse


if __name__ == "__main__":
    def make_params(key, C, Cr):
        k = jax.random.split(key, 6)
        w1 = 0.1 * jax.random.normal(k[0], (Cr, C), jnp.float32)  # cSE conv1 w
        b1 = 0.1 * jax.random.normal(k[1], (Cr, 1), jnp.float32)  # cSE conv1 b
        w2 = 0.1 * jax.random.normal(k[2], (C, Cr), jnp.float32)  # cSE conv2 w
        b2 = 0.1 * jax.random.normal(k[3], (C, 1), jnp.float32)   # cSE conv2 b
        ws = 0.1 * jax.random.normal(k[4], (1, C), jnp.float32)   # sSE conv w
        bs = 0.1 * jax.random.normal(k[5], (1, 1), jnp.float32)   # sSE conv b
        return w1, b1, w2, b2, ws, bs

    key = jax.random.PRNGKey(0)
    cases = [
        # (N, C, H, W, reduction, block_budget_bytes)
        (2, 32, 16, 16, 16, 4 * 1024 * 1024),  # fused path, grid=(2,)
        (3, 32, 10, 10, 16, 4 * 1024 * 1024),  # fused path, HW=100 (non-128)
        (2, 32, 20, 20, 16, 16 * 1024),        # forced streaming, masked tail
    ]
    for idx, (N, C, H, W, red, budget) in enumerate(cases):
        kx, kp, key = jax.random.split(key, 3)
        x = jax.random.normal(kx, (N, C, H, W), jnp.float32)
        params = make_params(kp, C, C // red)

        out = scse_forward(x, *params, block_budget_bytes=budget)
        out = jax.block_until_ready(out)

        ref = scse_reference(x, *params)
        assert out.shape == x.shape
        assert jnp.allclose(out, ref, atol=2e-5, rtol=2e-5), \
            f"mismatch vs reference in case {idx}"

    print("KERNEL_OK")
</pallas_src>

<mosaic_0001>
module attributes {stable_mosaic.version = 11 : i64} {
  func.func @scse_fused_kernel(%arg0: i32, %arg1: memref<1x32x256xf32, #tpu.memory_space<vmem>>, %arg2: memref<32x2xf32, #tpu.memory_space<vmem>>, %arg3: memref<1x2xf32, #tpu.memory_space<vmem>>, %arg4: memref<2x32xf32, #tpu.memory_space<vmem>>, %arg5: memref<1x32xf32, #tpu.memory_space<vmem>>, %arg6: memref<32x1xf32, #tpu.memory_space<vmem>>, %arg7: memref<1x1xf32, #tpu.memory_space<smem>>, %arg8: memref<1x32x256xf32, #tpu.memory_space<vmem>>) attributes {dimension_semantics = [#tpu.dimension_semantics<parallel>], iteration_bounds = array<i64: 2>, scalar_prefetch = 0 : i64, scratch_operands = 0 : i64, tpu.core_type = #tpu.core_type<tc>, window_params = [{transform_indices = @transform_0, window_bounds = array<i64: 1, 32, 256>}, {pipeline_mode = #tpu.pipeline_mode<synchronous>, transform_indices = @transform_1, window_bounds = array<i64: 32, 2>}, {pipeline_mode = #tpu.pipeline_mode<synchronous>, transform_indices = @transform_2, window_bounds = array<i64: 1, 2>}, {pipeline_mode = #tpu.pipeline_mode<synchronous>, transform_indices = @transform_3, window_bounds = array<i64: 2, 32>}, {pipeline_mode = #tpu.pipeline_mode<synchronous>, transform_indices = @transform_4, window_bounds = array<i64: 1, 32>}, {pipeline_mode = #tpu.pipeline_mode<synchronous>, transform_indices = @transform_5, window_bounds = array<i64: 32, 1>}, {transform_indices = @transform_6, window_bounds = array<i64: 1, 1>}, {transform_indices = @transform_7, window_bounds = array<i64: 1, 32, 256>}]} {
    %c0 = arith.constant 0 : index
    %c0_0 = arith.constant 0 : index
    %c0_1 = arith.constant 0 : index
    %0 = vector.load %arg1[%c0, %c0_0, %c0_1] : memref<1x32x256xf32, #tpu.memory_space<vmem>>, vector<1x32x256xf32>
    %cst = arith.constant dense<0.000000e+00> : vector<1x32xf32>
    %1 = vector.multi_reduction <add>, %0, %cst [2] : vector<1x32x256xf32> to vector<1x32xf32>
    %cst_2 = arith.constant 3.906250e-03 : f32
    %2 = vector.broadcast %cst_2 : f32 to vector<1x32xf32>
    %3 = arith.mulf %1, %2 : vector<1x32xf32>
    %c0_3 = arith.constant 0 : index
    %c0_4 = arith.constant 0 : index
    %4 = vector.load %arg2[%c0_3, %c0_4] : memref<32x2xf32, #tpu.memory_space<vmem>>, vector<32x2xf32>
    %cst_5 = arith.constant dense<0.000000e+00> : vector<1x2xf32>
    %5 = tpu.matmul %3, %4, %cst_5 {dimension_numbers = #tpu.dot_dimension_numbers<[1], [0], [0], [1], [0, 0, 1, 1], [], []>} : vector<1x32xf32>, vector<32x2xf32>, vector<1x2xf32> -> vector<1x2xf32>
    %c0_6 = arith.constant 0 : index
    %c0_7 = arith.constant 0 : index
    %6 = vector.load %arg3[%c0_6, %c0_7] : memref<1x2xf32, #tpu.memory_space<vmem>>, vector<1x2xf32>
    %7 = arith.addf %5, %6 : vector<1x2xf32>
    %cst_8 = arith.constant 0.000000e+00 : f32
    %8 = vector.broadcast %cst_8 : f32 to vector<1x2xf32>
    %9 = arith.maximumf %7, %8 : vector<1x2xf32>
    %c0_9 = arith.constant 0 : index
    %c0_10 = arith.constant 0 : index
    %10 = vector.load %arg4[%c0_9, %c0_10] : memref<2x32xf32, #tpu.memory_space<vmem>>, vector<2x32xf32>
    %cst_11 = arith.constant dense<0.000000e+00> : vector<1x32xf32>
    %11 = tpu.matmul %9, %10, %cst_11 {dimension_numbers = #tpu.dot_dimension_numbers<[1], [0], [0], [1], [0, 0, 1, 1], [], []>} : vector<1x2xf32>, vector<2x32xf32>, vector<1x32xf32> -> vector<1x32xf32>
    %c0_12 = arith.constant 0 : index
    %c0_13 = arith.constant 0 : index
    %12 = vector.load %arg5[%c0_12, %c0_13] : memref<1x32xf32, #tpu.memory_space<vmem>>, vector<1x32xf32>
    %13 = arith.addf %11, %12 : vector<1x32xf32>
    %14 = arith.negf %13 : vector<1x32xf32>
    %15 = math.exp %14 : vector<1x32xf32>
    %cst_14 = arith.constant 1.000000e+00 : f32
    %16 = vector.broadcast %cst_14 : f32 to vector<1x32xf32>
    %17 = arith.addf %16, %15 : vector<1x32xf32>
    %18 = arith.divf %16, %17 : vector<1x32xf32>
    %c0_15 = arith.constant 0 : index
    %c0_16 = arith.constant 0 : index
    %19 = vector.load %arg6[%c0_15, %c0_16] : memref<32x1xf32, #tpu.memory_space<vmem>>, vector<32x1xf32>
    %20 = vector.shape_cast %19 : vector<32x1xf32> to vector<1x32x1xf32>
    %21 = vector.broadcast %20 : vector<1x32x1xf32> to vector<1x32x256xf32>
    %22 = arith.mulf %0, %21 : vector<1x32x256xf32>
    %cst_17 = arith.constant dense<0.000000e+00> : vector<1x256xf32>
    %23 = vector.multi_reduction <add>, %22, %cst_17 [1] : vector<1x32x256xf32> to vector<1x256xf32>
    %24 = vector.shape_cast %23 : vector<1x256xf32> to vector<1x1x256xf32>
    %c0_18 = arith.constant 0 : index
    %c0_19 = arith.constant 0 : index
    %25 = memref.load %arg7[%c0_18, %c0_19] : memref<1x1xf32, #tpu.memory_space<smem>>
    %26 = vector.broadcast %25 : f32 to vector<1x1x256xf32>
    %27 = arith.addf %24, %26 : vector<1x1x256xf32>
    %28 = arith.negf %27 : vector<1x1x256xf32>
    %29 = math.exp %28 : vector<1x1x256xf32>
    %cst_20 = arith.constant 1.000000e+00 : f32
    %30 = vector.broadcast %cst_20 : f32 to vector<1x1x256xf32>
    %31 = arith.addf %30, %29 : vector<1x1x256xf32>
    %32 = arith.divf %30, %31 : vector<1x1x256xf32>
    %c0_21 = arith.constant 0 : index
    %c0_22 = arith.constant 0 : index
    %c0_23 = arith.constant 0 : index
    %33 = vector.load %arg1[%c0_21, %c0_22, %c0_23] : memref<1x32x256xf32, #tpu.memory_space<vmem>>, vector<1x32x256xf32>
    %34 = vector.shape_cast %18 : vector<1x32xf32> to vector<1x32x1xf32>
    %35 = vector.broadcast %34 : vector<1x32x1xf32> to vector<1x32x256xf32>
    %36 = vector.broadcast %32 : vector<1x1x256xf32> to vector<1x32x256xf32>
    %37 = arith.addf %35, %36 : vector<1x32x256xf32>
    %38 = arith.mulf %33, %37 : vector<1x32x256xf32>
    %c0_24 = arith.constant 0 : index
    %c0_25 = arith.constant 0 : index
    %c0_26 = arith.constant 0 : index
    %39 = vector.load %arg8[%c0_24, %c0_25, %c0_26] : memref<1x32x256xf32, #tpu.memory_space<vmem>>, vector<1x32x256xf32>
    tpu.vector_store %arg8[%c0_24, %c0_25, %c0_26], %38 {strides = array<i32>} : memref<1x32x256xf32, #tpu.memory_space<vmem>>, vector<1x32x256xf32>,
    return
  }
  func.func @transform_0(%arg0: i32) -> (i32, i32, i32) {
    %c0_i32 = arith.constant 0 : i32
    %c0_i32_0 = arith.constant 0 : i32
    %c0_i32_1 = arith.constant 0 : i32
    return %arg0, %c0_i32, %c0_i32_0 : i32, i32, i32
  }
  func.func @transform_1(%arg0: i32) -> (i32, i32) {
    %c0_i32 = arith.constant 0 : i32
    %c0_i32_0 = arith.constant 0 : i32
    %c0_i32_1 = arith.constant 0 : i32
    return %c0_i32, %c0_i32_0 : i32, i32
  }
  func.func @transform_2(%arg0: i32) -> (i32, i32) {
    %c0_i32 = arith.constant 0 : i32
    %c0_i32_0 = arith.constant 0 : i32
    %c0_i32_1 = arith.constant 0 : i32
    return %c0_i32, %c0_i32_0 : i32, i32
  }
  func.func @transform_3(%arg0: i32) -> (i32, i32) {
    %c0_i32 = arith.constant 0 : i32
    %c0_i32_0 = arith.constant 0 : i32
    %c0_i32_1 = arith.constant 0 : i32
    return %c0_i32, %c0_i32_0 : i32, i32
  }
  func.func @transform_4(%arg0: i32) -> (i32, i32) {
    %c0_i32 = arith.constant 0 : i32
    %c0_i32_0 = arith.constant 0 : i32
    %c0_i32_1 = arith.constant 0 : i32
    return %c0_i32, %c0_i32_0 : i32, i32
  }
  func.func @transform_5(%arg0: i32) -> (i32, i32) {
    %c0_i32 = arith.constant 0 : i32
    %c0_i32_0 = arith.constant 0 : i32
    %c0_i32_1 = arith.constant 0 : i32
    return %c0_i32, %c0_i32_0 : i32, i32
  }
  func.func @transform_6(%arg0: i32) -> (i32, i32) {
    %c0_i32 = arith.constant 0 : i32
    %c0_i32_0 = arith.constant 0 : i32
    %c0_i32_1 = arith.constant 0 : i32
    return %c0_i32, %c0_i32_0 : i32, i32
  }
  func.func @transform_7(%arg0: i32) -> (i32, i32, i32) {
    %c0_i32 = arith.constant 0 : i32
    %c0_i32_0 = arith.constant 0 : i32
    %c0_i32_1 = arith.constant 0 : i32
    return %arg0, %c0_i32, %c0_i32_0 : i32, i32, i32
  }
}

</mosaic_0001>

<llo_original>
// kernel: tpu_custom_call.1
$region0: #{tpu_custom_call.1}
  #allocation0 [shape = 'u32[]', space=smem, size = 0x4, offset = 0x4, fixed_abs, tag = 'smem constant byte address 0x4 - core index']
  #allocation1 [shape = 'u32[72,128]{1,0:T(1,128)}', space=vmem, size = 0x9000, scoped, tag = 'internal scratch']
  #allocation2 [shape = 'f32[1,1]{1,0:T(1,128)S(6)}', space=smem, size = 0x200, scoped, tag = 'scoped memory for tpu_custom_call.1']
  %s0 = inlined_call_operand.hbm [shape: f32[2,32,256], index: 0, kind: input, shape index: {}]
  %s1 = inlined_call_operand.vmem [shape: f32[32,2], index: 1, kind: input, shape index: {}]
  %s2 = inlined_call_operand.vmem [shape: f32[1,2], index: 2, kind: input, shape index: {}]
  %s3 = inlined_call_operand.vmem [shape: f32[2,32], index: 3, kind: input, shape index: {}]
  %s4 = inlined_call_operand.vmem [shape: f32[1,32], index: 4, kind: input, shape index: {}]
  %s5 = inlined_call_operand.vmem [shape: f32[32,1], index: 5, kind: input, shape index: {}]
  %s6 = inlined_call_operand.<no memory space> [shape: f32[1,1], index: 6, kind: input, shape index: {}]
  %s7 = inlined_call_operand.hbm [shape: f32[2,32,256], index: 7, kind: output, shape index: {}]
  %s8 = sld [smem:[#allocation0]]
  $region65: #{tpu_custom_call.1} parent=0
    _
  %s10 = ssub.s32 1, %s8
  %s11 = scalar_select 0, %s10, %s8
  %12 = sst [smem:[#allocation2]] %s6
  $region1: #{tpu_custom_call.1} parent=0
    #allocation3 [shape = 'u8[65536]{0}', space=vmem, size = 0x10000, scoped, tag = 'input window, operand 0']
    #allocation4 [shape = 's32[2]{0}', space=sflag, size = 0x8, scoped, tag = 'scoped memory for tpu_custom_call.1']
    #allocation5 [shape = 's32[2]{0}', space=sflag, size = 0x8, scoped, tag = 'scoped memory for tpu_custom_call.1']
    #allocation6 [shape = 'u8[65536]{0}', space=vmem, size = 0x10000, scoped, tag = 'output window, operand 0']
    %13 = vsyncpa [#allocation4], 0
    %s14 = scalar_lea.sflag [#allocation4], 1
    %15 = vsyncpa %s14, 0
    %16 = vsyncpa [#allocation5], 0
    %s17 = scalar_lea.sflag [#allocation5], 1
    %18 = vsyncpa %s17, 0
    loop: start=0, step=1, limit=4
    $region2: #{tpu_custom_call.1} parent=1 // loop_pre_header
      _
    $region3: #{tpu_custom_call.1} parent=1 // loop_header
      %s20 = sphi 0, %s24
      %p21 = scmp.ge.s32.totalorder %s20, 4
      %s30 = sphi 0, %s32
      %s33 = sphi 0, %s30
      %s34 = sphi 0, %s33
      %s50 = sphi 0, %s34
      %s54 = sphi 0, %s54
      %s56 = sphi 0, %s54
      %s57 = sphi 0, %s56
      %s71 = sphi 0, %s57
      %s75 = sphi 0, %s75
      %s77 = sphi 0, %s75
      %s78 = sphi 0, %s77
      %s92 = sphi 0, %s78
      %s96 = sphi 0, %s96
      %s98 = sphi 0, %s96
      %s99 = sphi 0, %s98
      %s113 = sphi 0, %s99
      %s117 = sphi 0, %s117
      %s119 = sphi 0, %s117
      %s120 = sphi 0, %s119
      %s134 = sphi 0, %s120
      %s138 = sphi 0, %s138
      %s140 = sphi 0, %s138
      %s141 = sphi 0, %s140
      %s155 = sphi 0, %s141
      %s159 = sphi 0, %s159
      %s161 = sphi 0, %s159
      %s162 = sphi 0, %s161
      %s176 = sphi 0, %s162
      %s182 = sphi 0, %s184
      %s185 = sphi 0, %s182
      %s186 = sphi 0, %s185
      %s202 = sphi 0, %s186
    $region4: #{tpu_custom_call.1} parent=1 // loop_header_branch
      %23 = sbr.rel (%p21) target = $region8
    $region5: #{tpu_custom_call.1} parent=1 // loop_body
      %s25 = ssub.s32 %s20, 1
      %s26 = ssub.s32 %s20, 2
      %s27 = sadd.s32 %s20, 1
      %s28 = ssub.s32 %s20, %s27
      %p29 = scmp.eq.s32.totalorder %s28, 0
      %s31 = sadd.s32 %s30, 1
      %s32 = scalar_select %p29, %s30, %s31
      %p35 = pneg %p29
      %p36 = scmp.eq.s32.totalorder %s20, 1
      %p37 = por %p35, %p36
      %p38 = scmp.ne.s32.totalorder %s30, %s33
      %p39 = scmp.eq.s32.totalorder %s20, 0
      %p40 = por %p38, %p39
      %p41 = scmp.ne.s32.totalorder %s30, %s33
      %p42 = scmp.eq.s32.totalorder %s25, 1
      %p43 = por %p41, %p42
      %p44 = scmp.ne.s32.totalorder %s33, %s34
      %p45 = scmp.eq.s32.totalorder %s25, 0
      %p46 = por %p44, %p45
      %p47 = scmp.ne.s32.totalorder %s33, %s34
      %p48 = scmp.eq.s32.totalorder %s26, 1
      %p49 = por %p47, %p48
      %p51 = scmp.ne.s32.totalorder %s34, %s50
      %p52 = scmp.eq.s32.totalorder %s26, 0
      %p53 = por %p51, %p52
      %s55 = sadd.s32 %s54, 1
      %p58 = scmp.eq.s32.totalorder %s20, 1
      %p59 = scmp.ne.s32.totalorder %s54, %s56
      %p60 = scmp.eq.s32.totalorder %s20, 0
      %p61 = por %p59, %p60
      %p62 = scmp.ne.s32.totalorder %s54, %s56
      %p63 = scmp.eq.s32.totalorder %s25, 1
      %p64 = por %p62, %p63
      %p65 = scmp.ne.s32.totalorder %s56, %s57
      %p66 = scmp.eq.s32.totalorder %s25, 0
      %p67 = por %p65, %p66
      %p68 = scmp.ne.s32.totalorder %s56, %s57
      %p69 = scmp.eq.s32.totalorder %s26, 1
      %p70 = por %p68, %p69
      %p72 = scmp.ne.s32.totalorder %s57, %s71
      %p73 = scmp.eq.s32.totalorder %s26, 0
      %p74 = por %p72, %p73
      %s76 = sadd.s32 %s75, 1
      %p79 = scmp.eq.s32.totalorder %s20, 1
      %p80 = scmp.ne.s32.totalorder %s75, %s77
      %p81 = scmp.eq.s32.totalorder %s20, 0
      %p82 = por %p80, %p81
      %p83 = scmp.ne.s32.totalorder %s75, %s77
      %p84 = scmp.eq.s32.totalorder %s25, 1
      %p85 = por %p83, %p84
      %p86 = scmp.ne.s32.totalorder %s77, %s78
      %p87 = scmp.eq.s32.totalorder %s25, 0
      %p88 = por %p86, %p87
      %p89 = scmp.ne.s32.totalorder %s77, %s78
      %p90 = scmp.eq.s32.totalorder %s26, 1
      %p91 = por %p89, %p90
      %p93 = scmp.ne.s32.totalorder %s78, %s92
      %p94 = scmp.eq.s32.totalorder %s26, 0
      %p95 = por %p93, %p94
      %s97 = sadd.s32 %s96, 1
      %p100 = scmp.eq.s32.totalorder %s20, 1
      %p101 = scmp.ne.s32.totalorder %s96, %s98
      %p102 = scmp.eq.s32.totalorder %s20, 0
      %p103 = por %p101, %p102
      %p104 = scmp.ne.s32.totalorder %s96, %s98
      %p105 = scmp.eq.s32.totalorder %s25, 1
      %p106 = por %p104, %p105
      %p107 = scmp.ne.s32.totalorder %s98, %s99
      %p108 = scmp.eq.s32.totalorder %s25, 0
      %p109 = por %p107, %p108
      %p110 = scmp.ne.s32.totalorder %s98, %s99
      %p111 = scmp.eq.s32.totalorder %s26, 1
      %p112 = por %p110, %p111
      %p114 = scmp.ne.s32.totalorder %s99, %s113
      %p115 = scmp.eq.s32.totalorder %s26, 0
      %p116 = por %p114, %p115
      %s118 = sadd.s32 %s117, 1
      %p121 = scmp.eq.s32.totalorder %s20, 1
      %p122 = scmp.ne.s32.totalorder %s117, %s119
      %p123 = scmp.eq.s32.totalorder %s20, 0
      %p124 = por %p122, %p123
      %p125 = scmp.ne.s32.totalorder %s117, %s119
      %p126 = scmp.eq.s32.totalorder %s25, 1
      %p127 = por %p125, %p126
      %p128 = scmp.ne.s32.totalorder %s119, %s120
      %p129 = scmp.eq.s32.totalorder %s25, 0
      %p130 = por %p128, %p129
      %p131 = scmp.ne.s32.totalorder %s119, %s120
      %p132 = scmp.eq.s32.totalorder %s26, 1
      %p133 = por %p131, %p132
      %p135 = scmp.ne.s32.totalorder %s120, %s134
      %p136 = scmp.eq.s32.totalorder %s26, 0
      %p137 = por %p135, %p136
      %s139 = sadd.s32 %s138, 1
      %p142 = scmp.eq.s32.totalorder %s20, 1
      %p143 = scmp.ne.s32.totalorder %s138, %s140
      %p144 = scmp.eq.s32.totalorder %s20, 0
      %p145 = por %p143, %p144
      %p146 = scmp.ne.s32.totalorder %s138, %s140
      %p147 = scmp.eq.s32.totalorder %s25, 1
      %p148 = por %p146, %p147
      %p149 = scmp.ne.s32.totalorder %s140, %s141
      %p150 = scmp.eq.s32.totalorder %s25, 0
      %p151 = por %p149, %p150
      %p152 = scmp.ne.s32.totalorder %s140, %s141
      %p153 = scmp.eq.s32.totalorder %s26, 1
      %p154 = por %p152, %p153
      %p156 = scmp.ne.s32.totalorder %s141, %s155
      %p157 = scmp.eq.s32.totalorder %s26, 0
      %p158 = por %p156, %p157
      %s160 = sadd.s32 %s159, 1
      %p163 = scmp.eq.s32.totalorder %s20, 1
      %p164 = scmp.ne.s32.totalorder %s159, %s161
      %p165 = scmp.eq.s32.totalorder %s20, 0
      %p166 = por %p164, %p165
      %p167 = scmp.ne.s32.totalorder %s159, %s161
      %p168 = scmp.eq.s32.totalorder %s25, 1
      %p169 = por %p167, %p168
      %p170 = scmp.ne.s32.totalorder %s161, %s162
      %p171 = scmp.eq.s32.totalorder %s25, 0
      %p172 = por %p170, %p171
      %p173 = scmp.ne.s32.totalorder %s161, %s162
      %p174 = scmp.eq.s32.totalorder %s26, 1
      %p175 = por %p173, %p174
      %p177 = scmp.ne.s32.totalorder %s162, %s176
      %p178 = scmp.eq.s32.totalorder %s26, 0
      %p179 = por %p177, %p178
      %s180 = ssub.s32 %s20, %s27
      %p181 = scmp.eq.s32.totalorder %s180, 0
      %s183 = sadd.s32 %s182, 1
      %s184 = scalar_select %p181, %s182, %s183
      %p187 = pneg %p181
      %p188 = scmp.eq.s32.totalorder %s20, 1
      %p189 = por %p187, %p188
      %p190 = scmp.ne.s32.totalorder %s182, %s185
      %p191 = scmp.eq.s32.totalorder %s20, 0
      %p192 = por %p190, %p191
      %p193 = scmp.ne.s32.totalorder %s182, %s185
      %p194 = scmp.eq.s32.totalorder %s25, 1
      %p195 = por %p193, %p194
      %p196 = scmp.ne.s32.totalorder %s185, %s186
      %p197 = scmp.eq.s32.totalorder %s25, 0
      %p198 = por %p196, %p197
      %p199 = scmp.ne.s32.totalorder %s185, %s186
      %p200 = scmp.eq.s32.totalorder %s26, 1
      %p201 = por %p199, %p200
      %p203 = scmp.ne.s32.totalorder %s186, %s202
      %p204 = scmp.eq.s32.totalorder %s26, 0
      %p205 = por %p203, %p204
      %p206 = scmp.le.s32.totalorder 1, %s20
      %p207 = scmp.lt.s32.totalorder %s20, 3
      %p208 = pnand %p206, %p207
      %p209 = pneg %p208
      // Predicated region
      $region9: #{tpu_custom_call.1} parent=5 // pred_check
        _
      $region10: #{tpu_custom_call.1} parent=5 // pred_check_branch
        %211 = sbr.rel (%p208) target = $region12
      $region11: #{tpu_custom_call.1} parent=5 // pred_region
        %s212 = ssub.s32 %s20, 1
        // Predicated region
        $region13: #{tpu_custom_call.1} parent=11 // pred_check
          %p213 = pneg %p67
        $region14: #{tpu_custom_call.1} parent=11 // pred_check_branch
          %215 = sbr.rel (%p213) target = $region16
        $region15: #{tpu_custom_call.1} parent=11 // pred_region
          _
        $region16: #{tpu_custom_call.1} parent=11 // pred_fallthru
          _
        // Predicated region
        $region17: #{tpu_custom_call.1} parent=11 // pred_check
          %p216 = pneg %p88
        $region18: #{tpu_custom_call.1} parent=11 // pred_check_branch
          %218 = sbr.rel (%p216) target = $region20
        $region19: #{tpu_custom_call.1} parent=11 // pred_region
          _
        $region20: #{tpu_custom_call.1} parent=11 // pred_fallthru
          _
        // Predicated region
        $region21: #{tpu_custom_call.1} parent=11 // pred_check
          %p219 = pneg %p109
        $region22: #{tpu_custom_call.1} parent=11 // pred_check_branch
          %221 = sbr.rel (%p219) target = $region24
        $region23: #{tpu_custom_call.1} parent=11 // pred_region
          _
        $region24: #{tpu_custom_call.1} parent=11 // pred_fallthru
          _
        // Predicated region
        $region25: #{tpu_custom_call.1} parent=11 // pred_check
          %p222 = pneg %p130
        $region26: #{tpu_custom_call.1} parent=11 // pred_check_branch
          %224 = sbr.rel (%p222) target = $region28
        $region27: #{tpu_custom_call.1} parent=11 // pred_region
          _
        $region28: #{tpu_custom_call.1} parent=11 // pred_fallthru
          _
        // Predicated region
        $region29: #{tpu_custom_call.1} parent=11 // pred_check
          %p225 = pneg %p151
        $region30: #{tpu_custom_call.1} parent=11 // pred_check_branch
          %227 = sbr.rel (%p225) target = $region32
        $region31: #{tpu_custom_call.1} parent=11 // pred_region
          _
        $region32: #{tpu_custom_call.1} parent=11 // pred_fallthru
          _
        // Predicated region
        $region33: #{tpu_custom_call.1} parent=11 // pred_check
          %p228 = pneg %p172
        $region34: #{tpu_custom_call.1} parent=11 // pred_check_branch
          %230 = sbr.rel (%p228) target = $region36
        $region35: #{tpu_custom_call.1} parent=11 // pred_region
          _
        $region36: #{tpu_custom_call.1} parent=11 // pred_fallthru
          _
      $region12: #{tpu_custom_call.1} parent=5 // pred_fallthru
        _
      %p231 = scmp.lt.s32.totalorder %s20, 2
      // Predicated region
      $region37: #{tpu_custom_call.1} parent=5 // pred_check
        %p232 = pneg %p231
      $region38: #{tpu_custom_call.1} parent=5 // pred_check_branch
        %234 = sbr.rel (%p232) target = $region40
      $region39: #{tpu_custom_call.1} parent=5 // pred_region
        // Predicated region
        $region41: #{tpu_custom_call.1} parent=39 // pred_check
          %p235 = pneg %p40
        $region42: #{tpu_custom_call.1} parent=39 // pred_check_branch
          %237 = sbr.rel (%p235) target = $region44
        $region43: #{tpu_custom_call.1} parent=39 // pred_region
          %s238 = sand.u32 %s30, 1
          %s239 = scalar_lea.sflag [#allocation4], %s238
          %s240 = sand.u32 %s30, 1
          %s241 = smul.addr %s240, 64
          %s242 = scalar_lea.vmem [#allocation3], %s241
          %244 = vsyncadd %s239, 0
          %s245 = smul.addr %s20, 8
          %s246 = smul.addr %s245, 8
          %s247 = scalar_lea.hbm %s0, %s246
          %s248 = sshll.u32 %s247, 4
          %s249 = int_to_ptr.hbm [resolvable:$true] %s248
          %s250 = sshll.u32 %s242, 4
          %s251 = int_to_ptr.vmem [resolvable:$true] %s250
          %256 = dma.hbm_to_vmem [thread:$0]  %s249, 1024, %s251, %s239, 256, 256, 16
        $region44: #{tpu_custom_call.1} parent=39 // pred_fallthru
          _
      $region40: #{tpu_custom_call.1} parent=5 // pred_fallthru
        _
      %p257 = scmp.le.s32.totalorder 1, %s20
      %p258 = scmp.lt.s32.totalorder %s20, 3
      %p259 = pnand %p257, %p258
      %p260 = pneg %p259
      // Predicated region
      $region45: #{tpu_custom_call.1} parent=5 // pred_check
        _
      $region46: #{tpu_custom_call.1} parent=5 // pred_check_branch
        %262 = sbr.rel (%p259) target = $region48
      $region47: #{tpu_custom_call.1} parent=5 // pred_region
        %s263 = ssub.s32 %s20, 1
        %s264 = sand.u32 %s33, 1
        %s265 = scalar_lea.sflag [#allocation4], %s264
        %s266 = sand.u32 %s33, 1
        %s267 = smul.addr %s266, 64
        %s268 = scalar_lea.vmem [#allocation3], %s267
        // Predicated region
        $region49: #{tpu_custom_call.1} parent=47 // pred_check
          %p269 = pneg %p46
        $region50: #{tpu_custom_call.1} parent=47 // pred_check_branch
          %271 = sbr.rel (%p269) target = $region52
        $region51: #{tpu_custom_call.1} parent=47 // pred_region
          %273 = dma.done %s265, 1024
        $region52: #{tpu_custom_call.1} parent=47 // pred_fallthru
          _
        %s274 = sand.u32 %s33, 1
        %s275 = scalar_lea.sflag [#allocation4], %s274
        %s276 = sand.u32 %s33, 1
        %s277 = smul.addr %s276, 64
        %s278 = scalar_lea.vmem [#allocation3], %s277
        %p279 = pneg %p46
        %p280 = pneg %p43
        %p281 = pneg %p67
        %p282 = pneg %p64
        %p283 = pneg %p88
        %p284 = pneg %p85
        %p285 = pneg %p109
        %p286 = pneg %p106
        %p287 = pneg %p130
        %p288 = pneg %p127
        %p289 = pneg %p151
        %p290 = pneg %p148
        %p291 = pneg %p172
        %p292 = pneg %p169
        %p293 = pneg %p198
        %p294 = pneg %p195
        %s295 = sand.u32 %s185, 1
        %s296 = scalar_lea.sflag [#allocation5], %s295
        %s297 = sand.u32 %s185, 1
        %s298 = smul.addr %s297, 64
        %s299 = scalar_lea.vmem [#allocation6], %s298
        %v300 = vld [vmem:[%s268] sm:$0xff]
        %v301 = vld [vmem:[%s268 + $0x8] sm:$0xff]
        %v302 = vld [vmem:[%s268 + $0x10] sm:$0xff]
        %v303 = vld [vmem:[%s268 + $0x18] sm:$0xff]
        %v304 = vld [vmem:[%s268 + $0x20] sm:$0xff]
        %v305 = vld [vmem:[%s268 + $0x28] sm:$0xff]
        %v306 = vld [vmem:[%s268 + $0x30] sm:$0xff]
        %v307 = vld [vmem:[%s268 + $0x38] sm:$0xff]
        %v308 = vadd.f32 %v300, %v301
        %309 = vadd.xlane.f32.xlu0 %v308
        %v310 = vpop.xlane.xlu0 %309
        %v311 = vadd.f32 %v302, %v303
        %312 = vadd.xlane.f32.xlu0 %v311
        %v313 = vpop.xlane.xlu0 %312
        %v314 = vadd.f32 %v304, %v305
        %315 = vadd.xlane.f32.xlu0 %v314
        %v316 = vpop.xlane.xlu0 %315
        %v317 = vadd.f32 %v306, %v307
        %318 = vadd.xlane.f32.xlu0 %v317
        %v319 = vpop.xlane.xlu0 %318
        %v320 = vmul.f32 %v310, 0.00390625
        %v321 = vmul.f32 %v313, 0.00390625
        %v322 = vmul.f32 %v316, 0.00390625
        %v323 = vmul.f32 %v319, 0.00390625
        %v324 = vld [vmem:[%s1] sm:$0xff]
        %v325 = vld [vmem:[%s1 + $0x8] sm:$0xff]
        %v326 = vld [vmem:[%s1 + $0x10] sm:$0xff]
        %v327 = vld [vmem:[%s1 + $0x18] sm:$0xff]
        %v328 = vld [vmem:[%s2] sm:$0x1]
        %v333 = vlaneseq
        %v334 = vand.u32 %v333, 127
        %v335 = vperm.slane %v320, %v334
        %v336 = vadd.s32 %v334, 4294967288
        %v337 = vperm.slane %v321, %v336
        %vm338 = vcmask 130112
        %v339 = vsel %vm338, %v337, %v335
        %v340 = vadd.s32 %v334, 4294967280
        %v341 = vperm.slane %v322, %v340
        %vm342 = vcmask 195712
        %v343 = vsel %vm342, %v341, %v339
        %v344 = vadd.s32 %v334, 4294967272
        %v345 = vperm.slane %v323, %v344
        %vm346 = vcmask 261312
        %v347 = vsel %vm346, %v345, %v343
        %vm348 = vcmask 261120
        %v349 = vsel %vm348, %v347, 0
        %351 = vmatpush.msra.mxu0 0.0
        %352 = vmatpush.msra.mxu0 0.0
        %353 = vmatpush.msra.mxu0 0.0
        %354 = vmatpush.msra.mxu0 0.0
        %355 = vmatpush.msra.mxu0 0.0
        %356 = vmatpush.msra.mxu0 0.0
        %357 = vmatpush.msra.mxu0 0.0
        %358 = vmatpush.msra.mxu0 0.0
        %359 = vmatpush.msra.mxu0 0.0
        %360 = vmatpush.msra.mxu0 0.0
        %361 = vmatpush.msra.mxu0 0.0
        %362 = vmatpush.msra.mxu0 0.0
        %363 = vmatpush.msra.mxu0 %v327
        %364 = vmatpush.msra.mxu0 %v326
        %365 = vmatpush.msra.mxu0 %v325
        %366 = vmatpush.msra.mxu0 %v324
        %367 = vmatmul.f32.gmra.mxu0 %v349
        %v368 = vpop.f32.mrf.mxu0
        %v369 = vadd.f32 %v328, %v368
        %370 = vdwg.mxu0
        %v371 = vmax.f32 %v369, 0.0
        %v372 = vld [vmem:[%s3] sm:$0x3]
        %v373 = vld [vmem:[%s4] sm:$0x1]
        %vm374 = vcmask 15360
        %v376 = vsel %vm374, %v371, 0
        %vm378 = vcmask 1041408
        %v380 = vsel %vm378, %v372, 0
        %382 = vmatpush.msra.mxu0 0.0
        %383 = vmatpush.msra.mxu0 0.0
        %384 = vmatpush.msra.mxu0 0.0
        %385 = vmatpush.msra.mxu0 0.0
        %386 = vmatpush.msra.mxu0 0.0
        %387 = vmatpush.msra.mxu0 0.0
        %388 = vmatpush.msra.mxu0 0.0
        %389 = vmatpush.msra.mxu0 0.0
        %390 = vmatpush.msra.mxu0 0.0
        %391 = vmatpush.msra.mxu0 0.0
        %392 = vmatpush.msra.mxu0 0.0
        %393 = vmatpush.msra.mxu0 0.0
        %394 = vmatpush.msra.mxu0 0.0
        %395 = vmatpush.msra.mxu0 0.0
        %396 = vmatpush.msra.mxu0 0.0
        %397 = vmatpush.msra.mxu0 %v380
        %398 = vmatmul.f32.gmra.mxu0 %v376
        %v399 = vpop.f32.mrf.mxu0
        %v400 = vadd.f32 %v373, %v399
        %401 = vdwg.mxu0
        %v402 = vxor.u32 %v400, 2147483648
        %v403 = vmul.f32 %v402, 1.442695
        %v404 = vpow.pop %v403
        %v405 = vadd.f32 %v404, 1.0
        %v406 = vrcp.pop %v405
        %v407 = vmul.f32 %v405, %v406
        %v408 = vsub.f32 1.0, %v407
        %v409 = vmul.f32 %v406, %v408
        %v410 = vadd.f32 %v406, %v409
        %vm411 = vweird.f32 %v405
        %vm412 = vweird.f32 %v406
        %vm413 = vmor %vm411, %vm412
        %v414 = vsel %vm413, %v406, %v410
        %v415 = vand.u32 2147483647, %v405
        %vm416 = vcmp.eq.f32.partialorder %v415, 8.507059e+37
        %v417 = vand.u32 %v405, 2147483648
        %v418 = vor.u32 1.1754944e-38, %v417
        %v419 = vsel %vm416, %v418, %v414
        %v420 = vmul.f32 1.0, %v419
        %v421 = vld [vmem:[%s5] sm:$0xff]
        %v422 = vld [vmem:[%s5 + $0x8] sm:$0xff]
        %v423 = vld [vmem:[%s5 + $0x10] sm:$0xff]
        %v424 = vld [vmem:[%s5 + $0x18] sm:$0xff]
        %426 = vset.pattern.permute.xlu0 0
        %427 = vperm.xlu0 %426, %v421
        %v428 = vpop.permute.xlu0 %427
        %431 = vset.pattern.permute.xlu0 0
        %432 = vperm.xlu0 %431, %v422
        %v433 = vpop.permute.xlu0 %432
        %436 = vset.pattern.permute.xlu0 0
        %437 = vperm.xlu0 %436, %v423
        %v438 = vpop.permute.xlu0 %437
        %441 = vset.pattern.permute.xlu0 0
        %442 = vperm.xlu0 %441, %v424
        %v443 = vpop.permute.xlu0 %442
        %v445 = vmul.f32 %v300, %v428
        %v446 = vmul.f32 %v301, %v428
        %v447 = vmul.f32 %v302, %v433
        %v448 = vmul.f32 %v303, %v433
        %v449 = vmul.f32 %v304, %v438
        %v450 = vmul.f32 %v305, %v438
        %v451 = vmul.f32 %v306, %v443
        %v452 = vmul.f32 %v307, %v443
        %v453 = vadd.f32 %v445, %v447
        %v454 = vadd.f32 %v453, %v449
        %v455 = vadd.f32 %v454, %v451
        %v456 = vrot.slane %v455, 4
        %v457 = vadd.f32 %v455, %v456
        %v458 = vrot.slane %v457, 2
        %v459 = vadd.f32 %v457, %v458
        %v460 = vrot.slane %v459, 1
        %v461 = vadd.f32 %v459, %v460
        %v462 = vadd.f32 %v446, %v448
        %v463 = vadd.f32 %v462, %v450
        %v464 = vadd.f32 %v463, %v452
        %v465 = vrot.slane %v464, 4
        %v466 = vadd.f32 %v464, %v465
        %v467 = vrot.slane %v466, 2
        %v468 = vadd.f32 %v466, %v467
        %v469 = vrot.slane %v468, 1
        %v470 = vadd.f32 %v468, %v469
        %s471 = sld [smem:[#allocation2]]
        %v472 = vstv %s471
        %v473 = vadd.f32 %v461, %v472
        %v474 = vadd.f32 %v470, %v472
        %v475 = vxor.u32 %v473, 2147483648
        %v476 = vxor.u32 %v474, 2147483648
        %v477 = vmul.f32 %v475, 1.442695
        %v478 = vpow.pop %v477
        %v479 = vmul.f32 %v476, 1.442695
        %v480 = vpow.pop %v479
        %v481 = vadd.f32 %v478, 1.0
        %v482 = vadd.f32 %v480, 1.0
        %v483 = vrcp.pop %v481
        %v484 = vmul.f32 %v481, %v483
        %v485 = vsub.f32 1.0, %v484
        %v486 = vmul.f32 %v483, %v485
        %v487 = vadd.f32 %v483, %v486
        %vm488 = vweird.f32 %v481
        %vm489 = vweird.f32 %v483
        %vm490 = vmor %vm488, %vm489
        %v491 = vsel %vm490, %v483, %v487
        %v492 = vand.u32 2147483647, %v481
        %vm493 = vcmp.eq.f32.partialorder %v492, 8.507059e+37
        %v494 = vand.u32 %v481, 2147483648
        %v495 = vor.u32 1.1754944e-38, %v494
        %v496 = vsel %vm493, %v495, %v491
        %v497 = vmul.f32 1.0, %v496
        %v498 = vrcp.pop %v482
        %v499 = vmul.f32 %v482, %v498
        %v500 = vsub.f32 1.0, %v499
        %v501 = vmul.f32 %v498, %v500
        %v502 = vadd.f32 %v498, %v501
        %vm503 = vweird.f32 %v482
        %vm504 = vweird.f32 %v498
        %vm505 = vmor %vm503, %vm504
        %v506 = vsel %vm505, %v498, %v502
        %v507 = vand.u32 2147483647, %v482
        %vm508 = vcmp.eq.f32.partialorder %v507, 8.507059e+37
        %v509 = vand.u32 %v482, 2147483648
        %v510 = vor.u32 1.1754944e-38, %v509
        %v511 = vsel %vm508, %v510, %v506
        %v512 = vmul.f32 1.0, %v511
        %v513 = vperm.slane %v420, 0
        %v514 = vlaneseq
        %v515 = vshrl.u32 %v514, 7
        %517 = vset.pattern.permute.xlu0 %v515
        %518 = vperm.xlu0 %517, %v513
        %v519 = vpop.permute.xlu0 %518
        %v520 = vlaneseq
        %v521 = vshrl.u32 %v520, 7
        %v522 = vadd.s32 %v521, 8
        %523 = vset.pattern.permute.xlu0 %v522
        %524 = vperm.xlu0 %523, %v513
        %v525 = vpop.permute.xlu0 %524
        %v526 = vlaneseq
        %v527 = vshrl.u32 %v526, 7
        %v528 = vadd.s32 %v527, 16
        %529 = vset.pattern.permute.xlu0 %v528
        %530 = vperm.xlu0 %529, %v513
        %v531 = vpop.permute.xlu0 %530
        %v532 = vlaneseq
        %v533 = vshrl.u32 %v532, 7
        %v534 = vadd.s32 %v533, 24
        %535 = vset.pattern.permute.xlu0 %v534
        %536 = vperm.xlu0 %535, %v513
        %v537 = vpop.permute.xlu0 %536
        %v538 = vadd.f32 %v519, %v497
        %v539 = vadd.f32 %v519, %v512
        %v540 = vadd.f32 %v525, %v497
        %v541 = vadd.f32 %v525, %v512
        %v542 = vadd.f32 %v531, %v497
        %v543 = vadd.f32 %v531, %v512
        %v544 = vadd.f32 %v537, %v497
        %v545 = vadd.f32 %v537, %v512
        %v546 = vmul.f32 %v300, %v538
        %v547 = vmul.f32 %v301, %v539
        %v548 = vmul.f32 %v302, %v540
        %v549 = vmul.f32 %v303, %v541
        %v550 = vmul.f32 %v304, %v542
        %v551 = vmul.f32 %v305, %v543
        %v552 = vmul.f32 %v306, %v544
        %v553 = vmul.f32 %v307, %v545
        %554 = vst [vmem:[%s299] sm:$0xff] %v546
        %555 = vst [vmem:[%s299 + $0x8] sm:$0xff] %v547
        %556 = vst [vmem:[%s299 + $0x10] sm:$0xff] %v548
        %557 = vst [vmem:[%s299 + $0x18] sm:$0xff] %v549
        %558 = vst [vmem:[%s299 + $0x20] sm:$0xff] %v550
        %559 = vst [vmem:[%s299 + $0x28] sm:$0xff] %v551
        %560 = vst [vmem:[%s299 + $0x30] sm:$0xff] %v552
        %561 = vst [vmem:[%s299 + $0x38] sm:$0xff] %v553
        %s562 = sand.u32 %s185, 1
        %s563 = scalar_lea.sflag [#allocation5], %s562
        %s564 = sand.u32 %s185, 1
        %s565 = smul.addr %s564, 64
        %s566 = scalar_lea.vmem [#allocation6], %s565
        // Predicated region
        $region53: #{tpu_custom_call.1} parent=47 // pred_check
          %p567 = pneg %p195
        $region54: #{tpu_custom_call.1} parent=47 // pred_check_branch
          %569 = sbr.rel (%p567) target = $region56
        $region55: #{tpu_custom_call.1} parent=47 // pred_region
          %571 = vsyncadd %s563, 0
          %s572 = smul.addr %s25, 8
          %s573 = smul.addr %s572, 8
          %s574 = scalar_lea.hbm %s7, %s573
          %s575 = sshll.u32 %s566, 4
          %s576 = int_to_ptr.vmem [resolvable:$true] %s575
          %s577 = sshll.u32 %s574, 4
          %s578 = int_to_ptr.hbm [resolvable:$true] %s577
          %583 = dma.vmem_to_hbm [thread:$0]  %s576, 1024, %s578, %s563, 256, 256, 16
        $region56: #{tpu_custom_call.1} parent=47 // pred_fallthru
          _
      $region48: #{tpu_custom_call.1} parent=5 // pred_fallthru
        _
      %p584 = scmp.le.s32.totalorder 2, %s20
      // Predicated region
      $region57: #{tpu_custom_call.1} parent=5 // pred_check
        %p585 = pneg %p584
      $region58: #{tpu_custom_call.1} parent=5 // pred_check_branch
        %587 = sbr.rel (%p585) target = $region60
      $region59: #{tpu_custom_call.1} parent=5 // pred_region
        %s588 = ssub.s32 %s20, 2
        // Predicated region
        $region61: #{tpu_custom_call.1} parent=59 // pred_check
          %p589 = pneg %p201
        $region62: #{tpu_custom_call.1} parent=59 // pred_check_branch
          %591 = sbr.rel (%p589) target = $region64
        $region63: #{tpu_custom_call.1} parent=59 // pred_region
          %s592 = sand.u32 %s186, 1
          %s593 = scalar_lea.sflag [#allocation5], %s592
          %s594 = sand.u32 %s186, 1
          %s595 = smul.addr %s594, 64
          %s596 = scalar_lea.vmem [#allocation6], %s595
          %598 = dma.done %s593, 1024
        $region64: #{tpu_custom_call.1} parent=59 // pred_fallthru
          _
      $region60: #{tpu_custom_call.1} parent=5 // pred_fallthru
        _
    $region6: #{tpu_custom_call.1} parent=1 // loop_footer
      %s24 = sadd.s32 1, %s20
    $region7: #{tpu_custom_call.1} parent=1 // loop_footer_branch
      %19 = sbr.rel target = $region3
    $region8: #{tpu_custom_call.1} parent=1 // loop_exit
      _
    %599 = vsyncpa [#allocation4], 1
    %s600 = scalar_lea.sflag [#allocation4], 1
    %601 = vsyncpa %s600, 1
    %602 = vsyncpa [#allocation5], 1
    %s603 = scalar_lea.sflag [#allocation5], 1
    %604 = vsyncpa %s603, 1

</llo_original>
